<compile_context>
chip_gen: v7x
topology: tpu7x:2x2x1
jax: 0.10.0
libtpu: 0.0.40
codegen_flags: <defaults>
</compile_context>

<pallas_src>
import functools
import math

import jax
import jax.numpy as jnp
from jax.experimental import pallas as pl
from jax.experimental.pallas import tpu as pltpu


def _round_up(x, m):
    return ((x + m - 1) // m) * m


# ---------------------------------------------------------------------------
# Kernel 1: Wh = X @ W  (the nn.Linear, bias=False).  bf16 inputs, f32 MXU
# accumulation, bf16 lane-dense output (f_out padded to a multiple of 128).
# ---------------------------------------------------------------------------
def _linear_kernel(x_ref, w_ref, wh_ref):
    wh = jnp.dot(x_ref[...], w_ref[...], preferred_element_type=jnp.float32)
    wh_ref[...] = wh.astype(wh_ref.dtype)


def _linear(x, w, tile):
    n, f_in = x.shape
    f_out = w.shape[1]
    cost = pl.CostEstimate(
        flops=int(2 * n * f_in * f_out),
        transcendentals=0,
        bytes_accessed=int(x.size * 2 + w.size * 2 + n * f_out * 2),
    )
    return pl.pallas_call(
        _linear_kernel,
        out_shape=jax.ShapeDtypeStruct((n, f_out), jnp.bfloat16),
        grid_spec=pltpu.PrefetchScalarGridSpec(
            num_scalar_prefetch=0,
            grid=(n // tile,),
            in_specs=[
                pl.BlockSpec((tile, f_in), lambda i: (i, 0)),   # X row tile
                pl.BlockSpec((f_in, f_out), lambda i: (0, 0)),  # W resident
            ],
            out_specs=pl.BlockSpec((tile, f_out), lambda i: (i, 0)),
        ),
        compiler_params=pltpu.CompilerParams(
            dimension_semantics=("parallel",),
        ),
        cost_estimate=cost,
    )(x, w)


# ---------------------------------------------------------------------------
# Kernel 2: out = relu(A @ Wh).  f32 accumulation directly in the output
# block, which is resident across the (innermost, "arbitrary") k axis.
# Two variants:
#   * resident: Wh is the full array, DMA'd to VMEM once; the kernel slices
#     the k-th (tk, f_out) block in-kernel (removes the (N/tm)x Wh re-read).
#   * streaming: classic per-(i,k) tile spec, used when Wh is too big for
#     VMEM residency.
# ---------------------------------------------------------------------------
def _aggregate_resident_kernel(tk, a_ref, wh_ref, o_ref):
    k = pl.program_id(1)

    @pl.when(k == 0)
    def _():
        o_ref[...] = jnp.zeros_like(o_ref)

    start = pl.multiple_of(k * tk, tk)
    wh_blk = wh_ref[pl.ds(start, tk), :]
    o_ref[...] += jnp.dot(a_ref[...], wh_blk,
                          preferred_element_type=jnp.float32)

    @pl.when(k == pl.num_programs(1) - 1)
    def _():
        # activation == ReLU (elementwise epilogue; swap here for other acts).
        o_ref[...] = jnp.maximum(o_ref[...], 0.0)


def _aggregate_stream_kernel(a_ref, wh_ref, o_ref):
    k = pl.program_id(1)

    @pl.when(k == 0)
    def _():
        o_ref[...] = jnp.zeros_like(o_ref)

    o_ref[...] += jnp.dot(a_ref[...], wh_ref[...],
                          preferred_element_type=jnp.float32)

    @pl.when(k == pl.num_programs(1) - 1)
    def _():
        o_ref[...] = jnp.maximum(o_ref[...], 0.0)


# Conservative budget for keeping Wh resident (v7x has 64 MiB VMEM per TC).
_RESIDENT_VMEM_BUDGET = 40 << 20


def _aggregate(adj, wh, tm, tk):
    n = adj.shape[0]
    f_out = wh.shape[1]

    wh_bytes = n * f_out * 2                             # bf16
    tile_bytes = 2 * (tm * tk * 2) + 2 * (tm * f_out * 4)  # A (x2 buf) + out (x2)
    resident = (2 * wh_bytes + tile_bytes) <= _RESIDENT_VMEM_BUDGET

    if resident:
        kernel = functools.partial(_aggregate_resident_kernel, tk)
        wh_spec = pl.BlockSpec((n, f_out), lambda i, k: (0, 0))   # DMA'd once
        footprint = 2 * wh_bytes + tile_bytes
        wh_hbm_reads = wh_bytes
    else:
        kernel = _aggregate_stream_kernel
        wh_spec = pl.BlockSpec((tk, f_out), lambda i, k: (k, 0))
        footprint = 2 * (tk * f_out * 2) + tile_bytes
        wh_hbm_reads = (n // tm) * wh_bytes

    vmem_limit = int(min(max(footprint + (4 << 20), 16 << 20), 60 << 20))

    cost = pl.CostEstimate(
        flops=int(2 * n * n * f_out),
        transcendentals=0,
        bytes_accessed=int(n * n * 2 + wh_hbm_reads + n * f_out * 4),
    )
    return pl.pallas_call(
        kernel,
        out_shape=jax.ShapeDtypeStruct((n, f_out), jnp.float32),
        grid_spec=pltpu.PrefetchScalarGridSpec(
            num_scalar_prefetch=0,
            grid=(n // tm, n // tk),
            in_specs=[
                pl.BlockSpec((tm, tk), lambda i, k: (i, k)),      # A tile (bf16)
                wh_spec,                                          # Wh (bf16)
            ],
            out_specs=pl.BlockSpec((tm, f_out), lambda i, k: (i, 0)),
        ),
        compiler_params=pltpu.CompilerParams(
            dimension_semantics=("parallel", "arbitrary"),
            vmem_limit_bytes=vmem_limit,
        ),
        cost_estimate=cost,
    )(adj, wh)


def gcn_single_head(x, weight, adj, *, tm=512, tk=512):
    """out = relu(A @ (dropout(X) @ W.T)); dropout is identity in eval mode.

    x:      (N, in_feats) node features
    weight: (out_feats, in_feats) -- PyTorch nn.Linear layout (bias=False)
    adj:    (N, N) dense adjacency, adj[v, u] = 1 iff directed edge u -> v
            (bf16 input accepted as-is; 0/1 is exact in bf16)
    """
    # TODO(synk): training-mode dropout would draw a keep-mask with
    # pltpu.prng_random_bits; in eval mode it is the identity.
    n, f_in = x.shape
    f_out = weight.shape[0]

    base = _round_up(n, 128)
    tm = min(tm, base)
    tk = min(tk, base)
    n_pad = _round_up(n, math.lcm(tm, tk))
    f_out_pad = _round_up(f_out, 128)                    # lane-dense output

    # bf16 operands (MXU fast path, halved HBM reads); f32 accumulation kept.
    x_bf = x.astype(jnp.bfloat16)
    w_bf = weight.T.astype(jnp.bfloat16)                 # (f_in, f_out)
    x_p = jnp.pad(x_bf, ((0, n_pad - n), (0, 0))) if n_pad != n else x_bf
    w_p = (jnp.pad(w_bf, ((0, 0), (0, f_out_pad - f_out)))
           if f_out_pad != f_out else w_bf)

    adj_bf = adj if adj.dtype == jnp.bfloat16 else adj.astype(jnp.bfloat16)
    a_p = (jnp.pad(adj_bf, ((0, n_pad - n), (0, n_pad - n)))
           if n_pad != n else adj_bf)

    wh = _linear(x_p, w_p, tm)               # (n_pad, f_out_pad) bf16
    out = _aggregate(a_p, wh, tm, tk)        # (n_pad, f_out_pad) f32
    return out[:n, :f_out]


def reference(x, weight, adj):
    wh = jnp.dot(x, weight.T, precision=jax.lax.Precision.HIGHEST)
    h = jnp.dot(adj, wh, precision=jax.lax.Precision.HIGHEST)
    return jax.nn.relu(h)


if __name__ == "__main__":
    key = jax.random.PRNGKey(0)
    N, F_IN, F_OUT = 256, 48, 64   # nodes, in_feats, out_feats
    k_x, k_w, k_e = jax.random.split(key, 3)

    # Node features.
    x = jax.random.normal(k_x, (N, F_IN), dtype=jnp.float32)

    # Xavier-uniform init of nn.Linear(in_feats, out_feats, bias=False).weight
    # (PyTorch layout: (out_feats, in_feats)).
    bound = (6.0 / (F_IN + F_OUT)) ** 0.5
    weight = jax.random.uniform(
        k_w, (F_OUT, F_IN), dtype=jnp.float32, minval=-bound, maxval=bound)

    # Deterministic synthetic directed graph, ~20% edge density.
    # adj[v, u] = 1 iff edge u -> v (messages flow u -> v, summed at v).
    adj = (jax.random.uniform(k_e, (N, N)) < 0.2).astype(jnp.float32)

    out = gcn_single_head(x, weight, adj)
    out = jax.block_until_ready(out)

    ref = reference(x, weight, adj)
    assert out.shape == (N, F_OUT)
    # Tolerance covers the intentional bf16 quantization of X, W and Wh
    # (adjacency 0/1 is exact in bf16; all accumulation is f32 on the MXU).
    assert jnp.allclose(out, ref, atol=0.2, rtol=0.02), (
        "mismatch vs. JAX reference: max abs diff "
        f"{float(jnp.max(jnp.abs(out - ref)))}")
    print("KERNEL_OK")
</pallas_src>

<mosaic_0001>
module attributes {stable_mosaic.version = 11 : i64} {
  func.func @_linear_kernel(%arg0: i32, %arg1: memref<256x48xbf16, #tpu.memory_space<vmem>>, %arg2: memref<48x128xbf16, #tpu.memory_space<vmem>>, %arg3: memref<256x128xbf16, #tpu.memory_space<vmem>>) attributes {dimension_semantics = [#tpu.dimension_semantics<parallel>], iteration_bounds = array<i64: 1>, scalar_prefetch = 0 : i64, scratch_operands = 0 : i64, tpu.core_type = #tpu.core_type<tc>, window_params = [{transform_indices = @transform_0, window_bounds = array<i64: 256, 48>}, {pipeline_mode = #tpu.pipeline_mode<synchronous>, transform_indices = @transform_1, window_bounds = array<i64: 48, 128>}, {transform_indices = @transform_2, window_bounds = array<i64: 256, 128>}]} {
    %c0 = arith.constant 0 : index
    %c0_0 = arith.constant 0 : index
    %0 = vector.load %arg1[%c0, %c0_0] : memref<256x48xbf16, #tpu.memory_space<vmem>>, vector<256x48xbf16>
    %c0_1 = arith.constant 0 : index
    %c0_2 = arith.constant 0 : index
    %1 = vector.load %arg2[%c0_1, %c0_2] : memref<48x128xbf16, #tpu.memory_space<vmem>>, vector<48x128xbf16>
    %cst = arith.constant dense<0.000000e+00> : vector<256x128xf32>
    %2 = tpu.matmul %0, %1, %cst {dimension_numbers = #tpu.dot_dimension_numbers<[1], [0], [0], [1], [0, 0, 1, 1], [], []>} : vector<256x48xbf16>, vector<48x128xbf16>, vector<256x128xf32> -> vector<256x128xf32>
    %3 = arith.truncf %2 : vector<256x128xf32> to vector<256x128xbf16>
    %c0_3 = arith.constant 0 : index
    %c0_4 = arith.constant 0 : index
    %4 = vector.load %arg3[%c0_3, %c0_4] : memref<256x128xbf16, #tpu.memory_space<vmem>>, vector<256x128xbf16>
    tpu.vector_store %arg3[%c0_3, %c0_4], %3 {strides = array<i32>} : memref<256x128xbf16, #tpu.memory_space<vmem>>, vector<256x128xbf16>,
    return
  }
  func.func @transform_0(%arg0: i32) -> (i32, i32) {
    %c0_i32 = arith.constant 0 : i32
    %c0_i32_0 = arith.constant 0 : i32
    return %arg0, %c0_i32 : i32, i32
  }
  func.func @transform_1(%arg0: i32) -> (i32, i32) {
    %c0_i32 = arith.constant 0 : i32
    %c0_i32_0 = arith.constant 0 : i32
    %c0_i32_1 = arith.constant 0 : i32
    return %c0_i32, %c0_i32_0 : i32, i32
  }
  func.func @transform_2(%arg0: i32) -> (i32, i32) {
    %c0_i32 = arith.constant 0 : i32
    %c0_i32_0 = arith.constant 0 : i32
    return %arg0, %c0_i32 : i32, i32
  }
}

</mosaic_0001>

<llo_original>
// kernel: tpu_custom_call.1
$region0: #{tpu_custom_call.1}
  #allocation0 [shape = 'u32[]', space=smem, size = 0x4, offset = 0x4, fixed_abs, tag = 'smem constant byte address 0x4 - core index']
  #allocation1 [shape = 'u32[144,128]{1,0:T(1,128)}', space=vmem, size = 0x12000, scoped, tag = 'internal scratch']
  %s0 = inlined_call_operand.vmem [shape: bf16[256,48], index: 0, kind: input, shape index: {}]
  %s1 = inlined_call_operand.vmem [shape: bf16[48,128], index: 1, kind: input, shape index: {}]
  %s2 = inlined_call_operand.hbm [shape: bf16[256,128], index: 2, kind: output, shape index: {}]
  %s3 = sld [smem:[#allocation0]]
  $region18: #{tpu_custom_call.1} parent=0
    _
  %s5 = ssub.s32 1, %s3
  %s6 = scalar_select 0, %s5, %s3
  $region1: #{tpu_custom_call.1} parent=0
    #allocation2 [shape = 'u8[65536]{0}', space=vmem, size = 0x10000, scoped, tag = 'output window, operand 0, single buffered']
    #allocation3 [shape = 's32[1]{0}', space=sflag, size = 0x4, scoped, tag = 'scoped memory for tpu_custom_call.1']
    %7 = vsyncpa [#allocation3], 0
    // Predicated region
    $region2: #{tpu_custom_call.1} parent=1 // pred_check
      _
    $region3: #{tpu_custom_call.1} parent=1 // pred_check_branch
      %9 = sbr.rel (0) target = $region5
    $region4: #{tpu_custom_call.1} parent=1 // pred_region
      _
    $region5: #{tpu_custom_call.1} parent=1 // pred_fallthru
      _
    // Predicated region
    $region6: #{tpu_custom_call.1} parent=1 // pred_check
      _
    $region7: #{tpu_custom_call.1} parent=1 // pred_check_branch
      %11 = sbr.rel (0) target = $region9
    $region8: #{tpu_custom_call.1} parent=1 // pred_region
      _
    $region9: #{tpu_custom_call.1} parent=1 // pred_fallthru
      _
    %v13 = vld [vmem:[%s0] sm:$0xf]
    %v14 = vld [vmem:[%s0 + $0x4] sm:$0xf]
    %v15 = vld [vmem:[%s0 + $0x8] sm:$0xf]
    %v16 = vld [vmem:[%s0 + $0xc] sm:$0xf]
    %v17 = vld [vmem:[%s0 + $0x10] sm:$0xf]
    %v18 = vld [vmem:[%s0 + $0x14] sm:$0xf]
    %v19 = vld [vmem:[%s0 + $0x18] sm:$0xf]
    %v20 = vld [vmem:[%s0 + $0x1c] sm:$0xf]
    %v21 = vld [vmem:[%s0 + $0x20] sm:$0xf]
    %v22 = vld [vmem:[%s0 + $0x24] sm:$0xf]
    %v23 = vld [vmem:[%s0 + $0x28] sm:$0xf]
    %v24 = vld [vmem:[%s0 + $0x2c] sm:$0xf]
    %v25 = vld [vmem:[%s0 + $0x30] sm:$0xf]
    %v26 = vld [vmem:[%s0 + $0x34] sm:$0xf]
    %v27 = vld [vmem:[%s0 + $0x38] sm:$0xf]
    %v28 = vld [vmem:[%s0 + $0x3c] sm:$0xf]
    %v29 = vld [vmem:[%s0 + $0x40] sm:$0xf]
    %v30 = vld [vmem:[%s0 + $0x44] sm:$0xf]
    %v31 = vld [vmem:[%s0 + $0x48] sm:$0xf]
    %v32 = vld [vmem:[%s0 + $0x4c] sm:$0xf]
    %v33 = vld [vmem:[%s0 + $0x50] sm:$0xf]
    %v34 = vld [vmem:[%s0 + $0x54] sm:$0xf]
    %v35 = vld [vmem:[%s0 + $0x58] sm:$0xf]
    %v36 = vld [vmem:[%s0 + $0x5c] sm:$0xf]
    %v37 = vld [vmem:[%s0 + $0x60] sm:$0xf]
    %v38 = vld [vmem:[%s0 + $0x64] sm:$0xf]
    %v39 = vld [vmem:[%s0 + $0x68] sm:$0xf]
    %v40 = vld [vmem:[%s0 + $0x6c] sm:$0xf]
    %v41 = vld [vmem:[%s0 + $0x70] sm:$0xf]
    %v42 = vld [vmem:[%s0 + $0x74] sm:$0xf]
    %v43 = vld [vmem:[%s0 + $0x78] sm:$0xf]
    %v44 = vld [vmem:[%s0 + $0x7c] sm:$0xf]
    %v45 = vld [vmem:[%s1] sm:$0xf]
    %v46 = vld [vmem:[%s1 + $0x4] sm:$0xf]
    %v47 = vld [vmem:[%s1 + $0x8] sm:$0xf]
    %v48 = vld [vmem:[%s1 + $0xc] sm:$0xf]
    %v49 = vld [vmem:[%s1 + $0x10] sm:$0xf]
    %v50 = vld [vmem:[%s1 + $0x14] sm:$0xf]
    %v83 = vunpack.c.l.b16 %v13
    %v84 = vunpack.c.l.b16 %v14
    %v85 = vunpack.c.l.b16 %v15
    %v86 = vunpack.c.l.b16 %v16
    %v87 = vunpack.c.l.b16 %v17
    %v88 = vunpack.c.l.b16 %v18
    %v89 = vunpack.c.l.b16 %v19
    %v90 = vunpack.c.l.b16 %v20
    %v91 = vunpack.c.l.b16 %v21
    %v92 = vunpack.c.l.b16 %v22
    %v93 = vunpack.c.l.b16 %v23
    %v94 = vunpack.c.l.b16 %v24
    %v95 = vunpack.c.l.b16 %v25
    %v96 = vunpack.c.l.b16 %v26
    %v97 = vunpack.c.l.b16 %v27
    %v98 = vunpack.c.l.b16 %v28
    %v99 = vunpack.c.l.b16 %v29
    %v100 = vunpack.c.l.b16 %v30
    %v101 = vunpack.c.l.b16 %v31
    %v102 = vunpack.c.l.b16 %v32
    %v103 = vunpack.c.l.b16 %v33
    %v104 = vunpack.c.l.b16 %v34
    %v105 = vunpack.c.l.b16 %v35
    %v106 = vunpack.c.l.b16 %v36
    %v107 = vunpack.c.l.b16 %v37
    %v108 = vunpack.c.l.b16 %v38
    %v109 = vunpack.c.l.b16 %v39
    %v110 = vunpack.c.l.b16 %v40
    %v111 = vunpack.c.l.b16 %v41
    %v112 = vunpack.c.l.b16 %v42
    %v113 = vunpack.c.l.b16 %v43
    %v114 = vunpack.c.l.b16 %v44
    %v115 = vpack.c.b16 %v84, %v83
    %v116 = vpack.c.b16 %v86, %v85
    %v117 = vpack.c.b16 %v88, %v87
    %v118 = vpack.c.b16 %v90, %v89
    %v119 = vpack.c.b16 %v92, %v91
    %v120 = vpack.c.b16 %v94, %v93
    %v121 = vpack.c.b16 %v96, %v95
    %v122 = vpack.c.b16 %v98, %v97
    %v123 = vpack.c.b16 %v100, %v99
    %v124 = vpack.c.b16 %v102, %v101
    %v125 = vpack.c.b16 %v104, %v103
    %v126 = vpack.c.b16 %v106, %v105
    %v127 = vpack.c.b16 %v108, %v107
    %v128 = vpack.c.b16 %v110, %v109
    %v129 = vpack.c.b16 %v112, %v111
    %v130 = vpack.c.b16 %v114, %v113
    %v137 = vunpack.c.l.b16 %v45
    %v138 = vunpack.c.l.b16 %v46
    %v139 = vunpack.c.l.b16 %v47
    %v140 = vunpack.c.l.b16 %v48
    %v141 = vunpack.c.l.b16 %v49
    %v142 = vunpack.c.l.b16 %v50
    %v143 = vpack.c.b16 %v138, %v137
    %v144 = vpack.c.b16 %v140, %v139
    %v145 = vpack.c.b16 %v142, %v141
    %vm149 = vcmask 392192
    %v151 = vsel %vm149, %v115, 0
    %v154 = vsel %vm149, %v116, 0
    %v157 = vsel %vm149, %v117, 0
    %v160 = vsel %vm149, %v118, 0
    %v163 = vsel %vm149, %v119, 0
    %v166 = vsel %vm149, %v120, 0
    %v169 = vsel %vm149, %v121, 0
    %v172 = vsel %vm149, %v122, 0
    %v175 = vsel %vm149, %v123, 0
    %v178 = vsel %vm149, %v124, 0
    %v181 = vsel %vm149, %v125, 0
    %v184 = vsel %vm149, %v126, 0
    %v187 = vsel %vm149, %v127, 0
    %v190 = vsel %vm149, %v128, 0
    %v193 = vsel %vm149, %v129, 0
    %v196 = vsel %vm149, %v130, 0
    %198 = vmatprep.subr.bf16.mxu0 0
    %199 = vmatpush1.bf16.msra.mxu0 %v143
    %200 = vmatprep.subr.bf16.mxu0 0
    %201 = vmatpush1.bf16.msra.mxu0 %v144
    %202 = vmatprep.subr.bf16.mxu0 0
    %203 = vmatpush1.bf16.msra.mxu0 %v145
    %204 = vmatprep.subr.bf16.mxu0 0
    %205 = vmatpush1.bf16.msra.mxu0 0
    %206 = vmatprep.subr.bf16.mxu0 0
    %207 = vmatpush1.bf16.msra.mxu0 0
    %208 = vmatprep.subr.bf16.mxu0 0
    %209 = vmatpush1.bf16.msra.mxu0 0
    %210 = vmatprep.subr.bf16.mxu0 0
    %211 = vmatpush1.bf16.msra.mxu0 0
    %212 = vmatprep.subr.bf16.mxu0 0
    %213 = vmatpush1.bf16.msra.mxu0 0
    %214 = vmatprep.subr.bf16.mxu0 0
    %215 = vmatpush1.bf16.msra.mxu0 0
    %216 = vmatprep.subr.bf16.mxu0 0
    %217 = vmatpush1.bf16.msra.mxu0 0
    %218 = vmatprep.subr.bf16.mxu0 0
    %219 = vmatpush1.bf16.msra.mxu0 0
    %220 = vmatprep.subr.bf16.mxu0 0
    %221 = vmatpush1.bf16.msra.mxu0 0
    %222 = vmatprep.subr.bf16.mxu0 0
    %223 = vmatpush1.bf16.msra.mxu0 0
    %224 = vmatprep.subr.bf16.mxu0 0
    %225 = vmatpush1.bf16.msra.mxu0 0
    %226 = vmatprep.subr.bf16.mxu0 0
    %227 = vmatpush1.bf16.msra.mxu0 0
    %228 = vmatprep.subr.bf16.mxu0 0
    %229 = vmatpush1.bf16.msra.mxu0 0
    %230 = vmatprep.mubr.bf16.mxu0 0
    %231 = vmatmul.mubr.bf16.gmra.mrb[0].mxu0 %v151
    %v232 = vpop.f32.mrb[0].mxu0
    %v233 = vadd.f32 0.0, %v232
    %v234 = vpop.f32.mrb[0].mxu0
    %v235 = vpop.f32.mrb[0].mxu0
    %v236 = vadd.f32 0.0, %v235
    %v237 = vpop.f32.mrb[0].mxu0
    %238 = vmatprep.mubr.bf16.mxu0 0
    %239 = vmatmul.mubr.bf16.gmra.mrb[0].mxu0 %v154
    %v240 = vpop.f32.mrb[0].mxu0
    %v241 = vadd.f32 0.0, %v240
    %v242 = vpop.f32.mrb[0].mxu0
    %v243 = vpop.f32.mrb[0].mxu0
    %v244 = vadd.f32 0.0, %v243
    %v245 = vpop.f32.mrb[0].mxu0
    %246 = vmatprep.mubr.bf16.mxu0 0
    %247 = vmatmul.mubr.bf16.gmra.mrb[0].mxu0 %v157
    %v248 = vpop.f32.mrb[0].mxu0
    %v249 = vadd.f32 0.0, %v248
    %v250 = vpop.f32.mrb[0].mxu0
    %v251 = vpop.f32.mrb[0].mxu0
    %v252 = vadd.f32 0.0, %v251
    %v253 = vpop.f32.mrb[0].mxu0
    %254 = vmatprep.mubr.bf16.mxu0 0
    %255 = vmatmul.mubr.bf16.gmra.mrb[0].mxu0 %v160
    %v256 = vpop.f32.mrb[0].mxu0
    %v257 = vadd.f32 0.0, %v256
    %v258 = vpop.f32.mrb[0].mxu0
    %v259 = vpop.f32.mrb[0].mxu0
    %v260 = vadd.f32 0.0, %v259
    %v261 = vpop.f32.mrb[0].mxu0
    %262 = vmatprep.mubr.bf16.mxu0 0
    %263 = vmatmul.mubr.bf16.gmra.mrb[0].mxu0 %v163
    %v264 = vpop.f32.mrb[0].mxu0
    %v265 = vadd.f32 0.0, %v264
    %v266 = vpop.f32.mrb[0].mxu0
    %v267 = vpop.f32.mrb[0].mxu0
    %v268 = vadd.f32 0.0, %v267
    %v269 = vpop.f32.mrb[0].mxu0
    %270 = vmatprep.mubr.bf16.mxu0 0
    %271 = vmatmul.mubr.bf16.gmra.mrb[0].mxu0 %v166
    %v272 = vpop.f32.mrb[0].mxu0
    %v273 = vadd.f32 0.0, %v272
    %v274 = vpop.f32.mrb[0].mxu0
    %v275 = vpop.f32.mrb[0].mxu0
    %v276 = vadd.f32 0.0, %v275
    %v277 = vpop.f32.mrb[0].mxu0
    %278 = vmatprep.mubr.bf16.mxu0 0
    %279 = vmatmul.mubr.bf16.gmra.mrb[0].mxu0 %v169
    %v280 = vpop.f32.mrb[0].mxu0
    %v281 = vadd.f32 0.0, %v280
    %v282 = vpop.f32.mrb[0].mxu0
    %v283 = vpop.f32.mrb[0].mxu0
    %v284 = vadd.f32 0.0, %v283
    %v285 = vpop.f32.mrb[0].mxu0
    %286 = vmatprep.mubr.bf16.mxu0 0
    %287 = vmatmul.mubr.bf16.gmra.mrb[0].mxu0 %v172
    %v288 = vpop.f32.mrb[0].mxu0
    %v289 = vadd.f32 0.0, %v288
    %v290 = vpop.f32.mrb[0].mxu0
    %v291 = vpop.f32.mrb[0].mxu0
    %v292 = vadd.f32 0.0, %v291
    %v293 = vpop.f32.mrb[0].mxu0
    %294 = vmatprep.mubr.bf16.mxu0 0
    %295 = vmatmul.mubr.bf16.gmra.mrb[0].mxu0 %v175
    %v296 = vpop.f32.mrb[0].mxu0
    %v297 = vadd.f32 0.0, %v296
    %v298 = vpop.f32.mrb[0].mxu0
    %v299 = vpop.f32.mrb[0].mxu0
    %v300 = vadd.f32 0.0, %v299
    %v301 = vpop.f32.mrb[0].mxu0
    %302 = vmatprep.mubr.bf16.mxu0 0
    %303 = vmatmul.mubr.bf16.gmra.mrb[0].mxu0 %v178
    %v304 = vpop.f32.mrb[0].mxu0
    %v305 = vadd.f32 0.0, %v304
    %v306 = vpop.f32.mrb[0].mxu0
    %v307 = vpop.f32.mrb[0].mxu0
    %v308 = vadd.f32 0.0, %v307
    %v309 = vpop.f32.mrb[0].mxu0
    %310 = vmatprep.mubr.bf16.mxu0 0
    %311 = vmatmul.mubr.bf16.gmra.mrb[0].mxu0 %v181
    %v312 = vpop.f32.mrb[0].mxu0
    %v313 = vadd.f32 0.0, %v312
    %v314 = vpop.f32.mrb[0].mxu0
    %v315 = vpop.f32.mrb[0].mxu0
    %v316 = vadd.f32 0.0, %v315
    %v317 = vpop.f32.mrb[0].mxu0
    %318 = vmatprep.mubr.bf16.mxu0 0
    %319 = vmatmul.mubr.bf16.gmra.mrb[0].mxu0 %v184
    %v320 = vpop.f32.mrb[0].mxu0
    %v321 = vadd.f32 0.0, %v320
    %v322 = vpop.f32.mrb[0].mxu0
    %v323 = vpop.f32.mrb[0].mxu0
    %v324 = vadd.f32 0.0, %v323
    %v325 = vpop.f32.mrb[0].mxu0
    %326 = vmatprep.mubr.bf16.mxu0 0
    %327 = vmatmul.mubr.bf16.gmra.mrb[0].mxu0 %v187
    %v328 = vpop.f32.mrb[0].mxu0
    %v329 = vadd.f32 0.0, %v328
    %v330 = vpop.f32.mrb[0].mxu0
    %v331 = vpop.f32.mrb[0].mxu0
    %v332 = vadd.f32 0.0, %v331
    %v333 = vpop.f32.mrb[0].mxu0
    %334 = vmatprep.mubr.bf16.mxu0 0
    %335 = vmatmul.mubr.bf16.gmra.mrb[0].mxu0 %v190
    %v336 = vpop.f32.mrb[0].mxu0
    %v337 = vadd.f32 0.0, %v336
    %v338 = vpop.f32.mrb[0].mxu0
    %v339 = vpop.f32.mrb[0].mxu0
    %v340 = vadd.f32 0.0, %v339
    %v341 = vpop.f32.mrb[0].mxu0
    %342 = vmatprep.mubr.bf16.mxu0 0
    %343 = vmatmul.mubr.bf16.gmra.mrb[0].mxu0 %v193
    %v344 = vpop.f32.mrb[0].mxu0
    %v345 = vadd.f32 0.0, %v344
    %v346 = vpop.f32.mrb[0].mxu0
    %v347 = vpop.f32.mrb[0].mxu0
    %v348 = vadd.f32 0.0, %v347
    %v349 = vpop.f32.mrb[0].mxu0
    %350 = vmatprep.mubr.bf16.mxu0 0
    %351 = vmatmul.mubr.bf16.gmra.mrb[0].mxu0 %v196
    %v352 = vpop.f32.mrb[0].mxu0
    %v353 = vadd.f32 0.0, %v352
    %v354 = vpop.f32.mrb[0].mxu0
    %v355 = vpop.f32.mrb[0].mxu0
    %v356 = vadd.f32 0.0, %v355
    %v357 = vpop.f32.mrb[0].mxu0
    %358 = vdwg.mxu0
    %v359 = vpack.c.bf16 %v236, %v233
    %v360 = vpack.c.bf16 %v244, %v241
    %v361 = vpack.c.bf16 %v252, %v249
    %v362 = vpack.c.bf16 %v260, %v257
    %v363 = vpack.c.bf16 %v268, %v265
    %v364 = vpack.c.bf16 %v276, %v273
    %v365 = vpack.c.bf16 %v284, %v281
    %v366 = vpack.c.bf16 %v292, %v289
    %v367 = vpack.c.bf16 %v300, %v297
    %v368 = vpack.c.bf16 %v308, %v305
    %v369 = vpack.c.bf16 %v316, %v313
    %v370 = vpack.c.bf16 %v324, %v321
    %v371 = vpack.c.bf16 %v332, %v329
    %v372 = vpack.c.bf16 %v340, %v337
    %v373 = vpack.c.bf16 %v348, %v345
    %v374 = vpack.c.bf16 %v356, %v353
    %v391 = vunpack.c.l.b16 %v359
    %v392 = vunpack.c.h.b16 %v359
    %v393 = vunpack.c.l.b16 %v360
    %v394 = vunpack.c.h.b16 %v360
    %v395 = vunpack.c.l.b16 %v361
    %v396 = vunpack.c.h.b16 %v361
    %v397 = vunpack.c.l.b16 %v362
    %v398 = vunpack.c.h.b16 %v362
    %v399 = vunpack.c.l.b16 %v363
    %v400 = vunpack.c.h.b16 %v363
    %v401 = vunpack.c.l.b16 %v364
    %v402 = vunpack.c.h.b16 %v364
    %v403 = vunpack.c.l.b16 %v365
    %v404 = vunpack.c.h.b16 %v365
    %v405 = vunpack.c.l.b16 %v366
    %v406 = vunpack.c.h.b16 %v366
    %v407 = vunpack.c.l.b16 %v367
    %v408 = vunpack.c.h.b16 %v367
    %v409 = vunpack.c.l.b16 %v368
    %v410 = vunpack.c.h.b16 %v368
    %v411 = vunpack.c.l.b16 %v369
    %v412 = vunpack.c.h.b16 %v369
    %v413 = vunpack.c.l.b16 %v370
    %v414 = vunpack.c.h.b16 %v370
    %v415 = vunpack.c.l.b16 %v371
    %v416 = vunpack.c.h.b16 %v371
    %v417 = vunpack.c.l.b16 %v372
    %v418 = vunpack.c.h.b16 %v372
    %v419 = vunpack.c.l.b16 %v373
    %v420 = vunpack.c.h.b16 %v373
    %v421 = vunpack.c.l.b16 %v374
    %v422 = vunpack.c.h.b16 %v374
    %v423 = vpack.c.b16 %v391, %v391
    %v424 = vpack.c.b16 %v392, %v392
    %v425 = vpack.c.b16 %v393, %v393
    %v426 = vpack.c.b16 %v394, %v394
    %v427 = vpack.c.b16 %v395, %v395
    %v428 = vpack.c.b16 %v396, %v396
    %v429 = vpack.c.b16 %v397, %v397
    %v430 = vpack.c.b16 %v398, %v398
    %v431 = vpack.c.b16 %v399, %v399
    %v432 = vpack.c.b16 %v400, %v400
    %v433 = vpack.c.b16 %v401, %v401
    %v434 = vpack.c.b16 %v402, %v402
    %v435 = vpack.c.b16 %v403, %v403
    %v436 = vpack.c.b16 %v404, %v404
    %v437 = vpack.c.b16 %v405, %v405
    %v438 = vpack.c.b16 %v406, %v406
    %v439 = vpack.c.b16 %v407, %v407
    %v440 = vpack.c.b16 %v408, %v408
    %v441 = vpack.c.b16 %v409, %v409
    %v442 = vpack.c.b16 %v410, %v410
    %v443 = vpack.c.b16 %v411, %v411
    %v444 = vpack.c.b16 %v412, %v412
    %v445 = vpack.c.b16 %v413, %v413
    %v446 = vpack.c.b16 %v414, %v414
    %v447 = vpack.c.b16 %v415, %v415
    %v448 = vpack.c.b16 %v416, %v416
    %v449 = vpack.c.b16 %v417, %v417
    %v450 = vpack.c.b16 %v418, %v418
    %v451 = vpack.c.b16 %v419, %v419
    %v452 = vpack.c.b16 %v420, %v420
    %v453 = vpack.c.b16 %v421, %v421
    %v454 = vpack.c.b16 %v422, %v422
    %487 = vst [vmem:[#allocation2] sm:$0xf] %v423
    %488 = vst [vmem:[#allocation2 + $0x4] sm:$0xf] %v424
    %489 = vst [vmem:[#allocation2 + $0x8] sm:$0xf] %v425
    %490 = vst [vmem:[#allocation2 + $0xc] sm:$0xf] %v426
    %491 = vst [vmem:[#allocation2 + $0x10] sm:$0xf] %v427
    %492 = vst [vmem:[#allocation2 + $0x14] sm:$0xf] %v428
    %493 = vst [vmem:[#allocation2 + $0x18] sm:$0xf] %v429
    %494 = vst [vmem:[#allocation2 + $0x1c] sm:$0xf] %v430
    %495 = vst [vmem:[#allocation2 + $0x20] sm:$0xf] %v431
    %496 = vst [vmem:[#allocation2 + $0x24] sm:$0xf] %v432
    %497 = vst [vmem:[#allocation2 + $0x28] sm:$0xf] %v433
    %498 = vst [vmem:[#allocation2 + $0x2c] sm:$0xf] %v434
    %499 = vst [vmem:[#allocation2 + $0x30] sm:$0xf] %v435
    %500 = vst [vmem:[#allocation2 + $0x34] sm:$0xf] %v436
    %501 = vst [vmem:[#allocation2 + $0x38] sm:$0xf] %v437
    %502 = vst [vmem:[#allocation2 + $0x3c] sm:$0xf] %v438
    %503 = vst [vmem:[#allocation2 + $0x40] sm:$0xf] %v439
    %504 = vst [vmem:[#allocation2 + $0x44] sm:$0xf] %v440
    %505 = vst [vmem:[#allocation2 + $0x48] sm:$0xf] %v441
    %506 = vst [vmem:[#allocation2 + $0x4c] sm:$0xf] %v442
    %507 = vst [vmem:[#allocation2 + $0x50] sm:$0xf] %v443
    %508 = vst [vmem:[#allocation2 + $0x54] sm:$0xf] %v444
    %509 = vst [vmem:[#allocation2 + $0x58] sm:$0xf] %v445
    %510 = vst [vmem:[#allocation2 + $0x5c] sm:$0xf] %v446
    %511 = vst [vmem:[#allocation2 + $0x60] sm:$0xf] %v447
    %512 = vst [vmem:[#allocation2 + $0x64] sm:$0xf] %v448
    %513 = vst [vmem:[#allocation2 + $0x68] sm:$0xf] %v449
    %514 = vst [vmem:[#allocation2 + $0x6c] sm:$0xf] %v450
    %515 = vst [vmem:[#allocation2 + $0x70] sm:$0xf] %v451
    %516 = vst [vmem:[#allocation2 + $0x74] sm:$0xf] %v452
    %517 = vst [vmem:[#allocation2 + $0x78] sm:$0xf] %v453
    %518 = vst [vmem:[#allocation2 + $0x7c] sm:$0xf] %v454
    // Predicated region
    $region10: #{tpu_custom_call.1} parent=1 // pred_check
      _
    $region11: #{tpu_custom_call.1} parent=1 // pred_check_branch
      %520 = sbr.rel (0) target = $region13
    $region12: #{tpu_custom_call.1} parent=1 // pred_region
      %s522 = ssub.s32 2048, 2048
      %523 = vsyncadd [#allocation3], %s522
      %s524 = sshll.u32 [#allocation2], 4
      %s525 = int_to_ptr.vmem [resolvable:$true] %s524
      %530 = dma.vmem_to_hbm [thread:$0]  %s525, 2048, %s2, [#allocation3], 64, 64, 4
    $region13: #{tpu_custom_call.1} parent=1 // pred_fallthru
      _
    // Predicated region
    $region14: #{tpu_custom_call.1} parent=1 // pred_check
      _
    $region15: #{tpu_custom_call.1} parent=1 // pred_check_branch
      %532 = sbr.rel (0) target = $region17
    $region16: #{tpu_custom_call.1} parent=1 // pred_region
      %533 = dma.done [#allocation3], 2048
    $region17: #{tpu_custom_call.1} parent=1 // pred_fallthru
      _
    %534 = vsyncpa [#allocation3], 1

</llo_original>
